<compile_context>
chip_gen: v5e
topology: v5e:2x2
jax: 0.10.0
libtpu: 0.0.40
codegen_flags: <defaults>
</compile_context>

<pallas_src>
import functools

import jax
import jax.numpy as jnp
from jax.experimental import pallas as pl
from jax.experimental.pallas import tpu as pltpu


def attend_kernel(a_ref, b_ref, w1_ref, b1_ref, w2_ref, b2_ref,
                  beta_ref, alpha_ref, *, bt, la, lb):
    A2 = a_ref[...]          # (bt*la, D) f32
    B2 = b_ref[...]          # (bt*lb, D) f32
    w1 = w1_ref[...]         # (D, H)
    b1 = b1_ref[...]         # (1, H)   (sublane-broadcast add, cheap)
    w2 = w2_ref[...]         # (H, H)
    b2 = b2_ref[...]         # (1, H)
    d = A2.shape[-1]
    h = w1.shape[-1]

    def f(x):
        # Batch folded into the matmul M-dim: one MXU matmul per layer.
        y = jnp.dot(x, w1, preferred_element_type=jnp.float32) + b1
        y = jnp.maximum(y, 0.0)
        y = jnp.dot(y, w2, preferred_element_type=jnp.float32) + b2
        return jnp.maximum(y, 0.0)

    f_A = f(A2).reshape(bt, la, h)       # (bt, la, H)
    f_B = f(B2).reshape(bt, lb, h)       # (bt, lb, H)

    # Score matrices: contract the last dims directly on the MXU, no XLU
    # transpose.  The "transposed" scores are a second (cheap) matmul
    # instead of e.T.
    e = jnp.einsum("blh,bmh->blm", f_A, f_B,
                   preferred_element_type=jnp.float32)    # (bt, la, lb)
    eT = jnp.einsum("bmh,blh->bml", f_B, f_A,
                    preferred_element_type=jnp.float32)   # (bt, lb, la)

    def softmax_last(x):
        m = jnp.max(x, axis=-1, keepdims=True)
        p = jnp.exp(x - m)
        s = jnp.sum(p, axis=-1, keepdims=True)
        return p * pl.reciprocal(s, approx=True)          # EUP vrcp

    p1 = softmax_last(e)                 # (bt, la, lb)
    p2 = softmax_last(eT)                # (bt, lb, la)

    B3 = B2.reshape(bt, lb, d)
    A3 = A2.reshape(bt, la, d)

    # bf16 MXU operands, f32 accumulation (probability-weighted averages are
    # numerically benign; scores above are kept in f32).
    beta = jnp.einsum("blm,bmd->bld",
                      p1.astype(jnp.bfloat16), B3.astype(jnp.bfloat16),
                      preferred_element_type=jnp.float32)  # (bt, la, D)
    alpha = jnp.einsum("bml,bld->bmd",
                       p2.astype(jnp.bfloat16), A3.astype(jnp.bfloat16),
                       preferred_element_type=jnp.float32)  # (bt, lb, D)

    beta_ref[...] = beta.reshape(bt * la, d).astype(beta_ref.dtype)
    alpha_ref[...] = alpha.reshape(bt * lb, d).astype(alpha_ref.dtype)


def attend(A, B, w1, b1, w2, b2, *, batch_tile=None):
    """A: (bsz, La, D), B: (bsz, Lb, D). Returns (beta, alpha)."""
    bsz, la, d = A.shape
    _, lb, _ = B.shape
    h = w1.shape[1]

    if batch_tile is None:
        # Batch several examples per grid step (big MXU M-dim) while keeping
        # >= 2 grid steps so the "parallel" axis can shard across v7x's 2 TCs.
        batch_tile = bsz // 2 if (bsz > 1 and bsz % 2 == 0) else bsz
    assert bsz % batch_tile == 0, "batch_tile must divide bsz"
    grid = (bsz // batch_tile,)

    # Layout plumbing only: flatten batch into the row (sublane) dim.
    A2 = A.reshape(bsz * la, d)
    B2 = B.reshape(bsz * lb, d)
    b1_2d = b1.reshape(1, h)
    b2_2d = b2.reshape(1, h)

    kernel = functools.partial(attend_kernel, bt=batch_tile, la=la, lb=lb)

    grid_spec = pltpu.PrefetchScalarGridSpec(
        num_scalar_prefetch=0,
        grid=grid,
        in_specs=[
            pl.BlockSpec((batch_tile * la, d), lambda i: (i, 0)),
            pl.BlockSpec((batch_tile * lb, d), lambda i: (i, 0)),
            pl.BlockSpec((d, h), lambda i: (0, 0)),   # grid-invariant weights
            pl.BlockSpec((1, h), lambda i: (0, 0)),
            pl.BlockSpec((h, h), lambda i: (0, 0)),
            pl.BlockSpec((1, h), lambda i: (0, 0)),
        ],
        out_specs=[
            pl.BlockSpec((batch_tile * la, d), lambda i: (i, 0)),
            pl.BlockSpec((batch_tile * lb, d), lambda i: (i, 0)),
        ],
    )

    beta2, alpha2 = pl.pallas_call(
        kernel,
        out_shape=(
            jax.ShapeDtypeStruct((bsz * la, d), A.dtype),
            jax.ShapeDtypeStruct((bsz * lb, d), A.dtype),
        ),
        grid_spec=grid_spec,
        compiler_params=pltpu.CompilerParams(
            dimension_semantics=("parallel",)),
    )(A2, B2, w1, b1_2d, w2, b2_2d)

    return beta2.reshape(bsz, la, d), alpha2.reshape(bsz, lb, d)


def attend_ref(A, B, w1, b1, w2, b2):
    """Pure-JAX f32 reference matching the PyTorch forward (eval mode)."""
    def f(x):
        y = jnp.maximum(x @ w1 + b1, 0.0)
        return jnp.maximum(y @ w2 + b2, 0.0)
    f_A = f(A)
    f_B = f(B)
    e = jnp.einsum("bld,bmd->blm", f_A, f_B)
    beta = jnp.einsum("blm,bmd->bld", jax.nn.softmax(e, axis=-1), B)
    alpha = jnp.einsum("bml,bld->bmd",
                       jax.nn.softmax(jnp.swapaxes(e, 1, 2), axis=-1), A)
    return beta, alpha


if __name__ == "__main__":
    num_inputs = 32     # D
    num_hiddens = 32    # H
    bsz, La, Lb = 4, 8, 8

    key = jax.random.PRNGKey(0)
    kA, kB, k1, k2, k3, k4 = jax.random.split(key, 6)

    A = jax.random.normal(kA, (bsz, La, num_inputs), dtype=jnp.float32)
    B = jax.random.normal(kB, (bsz, Lb, num_inputs), dtype=jnp.float32)

    # Deterministic "Linear" parameter init (scale ~ 1/sqrt(fan_in)).
    w1 = jax.random.normal(k1, (num_inputs, num_hiddens), jnp.float32) / jnp.sqrt(num_inputs)
    b1 = jax.random.normal(k2, (num_hiddens,), jnp.float32) * 0.01
    w2 = jax.random.normal(k3, (num_hiddens, num_hiddens), jnp.float32) / jnp.sqrt(num_hiddens)
    b2 = jax.random.normal(k4, (num_hiddens,), jnp.float32) * 0.01

    beta, alpha = attend(A, B, w1, b1, w2, b2)
    jax.block_until_ready((beta, alpha))

    beta_r, alpha_r = attend_ref(A, B, w1, b1, w2, b2)
    # Tolerance loosened vs. a pure-f32 kernel: bf16 MXU operands for the
    # prob@value matmuls and approx-reciprocal softmax denominators.
    assert jnp.allclose(beta, beta_r, atol=3e-2, rtol=3e-2)
    assert jnp.allclose(alpha, alpha_r, atol=3e-2, rtol=3e-2)

    print("KERNEL_OK")
</pallas_src>

<mosaic_0001>
module attributes {stable_mosaic.version = 11 : i64} {
  func.func @attend_kernel(%arg0: i32, %arg1: memref<16x32xf32, #tpu.memory_space<vmem>>, %arg2: memref<16x32xf32, #tpu.memory_space<vmem>>, %arg3: memref<32x32xf32, #tpu.memory_space<vmem>>, %arg4: memref<1x32xf32, #tpu.memory_space<vmem>>, %arg5: memref<32x32xf32, #tpu.memory_space<vmem>>, %arg6: memref<1x32xf32, #tpu.memory_space<vmem>>, %arg7: memref<16x32xf32, #tpu.memory_space<vmem>>, %arg8: memref<16x32xf32, #tpu.memory_space<vmem>>) attributes {dimension_semantics = [#tpu.dimension_semantics<parallel>], iteration_bounds = array<i64: 2>, scalar_prefetch = 0 : i64, scratch_operands = 0 : i64, tpu.core_type = #tpu.core_type<tc>, window_params = [{transform_indices = @transform_0, window_bounds = array<i64: 16, 32>}, {transform_indices = @transform_1, window_bounds = array<i64: 16, 32>}, {pipeline_mode = #tpu.pipeline_mode<synchronous>, transform_indices = @transform_2, window_bounds = array<i64: 32, 32>}, {pipeline_mode = #tpu.pipeline_mode<synchronous>, transform_indices = @transform_3, window_bounds = array<i64: 1, 32>}, {pipeline_mode = #tpu.pipeline_mode<synchronous>, transform_indices = @transform_4, window_bounds = array<i64: 32, 32>}, {pipeline_mode = #tpu.pipeline_mode<synchronous>, transform_indices = @transform_5, window_bounds = array<i64: 1, 32>}, {transform_indices = @transform_6, window_bounds = array<i64: 16, 32>}, {transform_indices = @transform_7, window_bounds = array<i64: 16, 32>}]} {
    %c0 = arith.constant 0 : index
    %c0_0 = arith.constant 0 : index
    %0 = vector.load %arg1[%c0, %c0_0] : memref<16x32xf32, #tpu.memory_space<vmem>>, vector<16x32xf32>
    %c0_1 = arith.constant 0 : index
    %c0_2 = arith.constant 0 : index
    %1 = vector.load %arg2[%c0_1, %c0_2] : memref<16x32xf32, #tpu.memory_space<vmem>>, vector<16x32xf32>
    %c0_3 = arith.constant 0 : index
    %c0_4 = arith.constant 0 : index
    %2 = vector.load %arg3[%c0_3, %c0_4] : memref<32x32xf32, #tpu.memory_space<vmem>>, vector<32x32xf32>
    %c0_5 = arith.constant 0 : index
    %c0_6 = arith.constant 0 : index
    %3 = vector.load %arg4[%c0_5, %c0_6] : memref<1x32xf32, #tpu.memory_space<vmem>>, vector<1x32xf32>
    %c0_7 = arith.constant 0 : index
    %c0_8 = arith.constant 0 : index
    %4 = vector.load %arg5[%c0_7, %c0_8] : memref<32x32xf32, #tpu.memory_space<vmem>>, vector<32x32xf32>
    %c0_9 = arith.constant 0 : index
    %c0_10 = arith.constant 0 : index
    %5 = vector.load %arg6[%c0_9, %c0_10] : memref<1x32xf32, #tpu.memory_space<vmem>>, vector<1x32xf32>
    %cst = arith.constant dense<0.000000e+00> : vector<16x32xf32>
    %6 = tpu.matmul %0, %2, %cst {dimension_numbers = #tpu.dot_dimension_numbers<[1], [0], [0], [1], [0, 0, 1, 1], [], []>} : vector<16x32xf32>, vector<32x32xf32>, vector<16x32xf32> -> vector<16x32xf32>
    %7 = vector.broadcast %3 : vector<1x32xf32> to vector<16x32xf32>
    %8 = arith.addf %6, %7 : vector<16x32xf32>
    %cst_11 = arith.constant 0.000000e+00 : f32
    %9 = vector.broadcast %cst_11 : f32 to vector<16x32xf32>
    %10 = arith.maximumf %8, %9 : vector<16x32xf32>
    %cst_12 = arith.constant dense<0.000000e+00> : vector<16x32xf32>
    %11 = tpu.matmul %10, %4, %cst_12 {dimension_numbers = #tpu.dot_dimension_numbers<[1], [0], [0], [1], [0, 0, 1, 1], [], []>} : vector<16x32xf32>, vector<32x32xf32>, vector<16x32xf32> -> vector<16x32xf32>
    %12 = vector.broadcast %5 : vector<1x32xf32> to vector<16x32xf32>
    %13 = arith.addf %11, %12 : vector<16x32xf32>
    %cst_13 = arith.constant 0.000000e+00 : f32
    %14 = vector.broadcast %cst_13 : f32 to vector<16x32xf32>
    %15 = arith.maximumf %13, %14 : vector<16x32xf32>
    %16 = vector.shape_cast %15 : vector<16x32xf32> to vector<2x8x32xf32>
    %cst_14 = arith.constant dense<0.000000e+00> : vector<16x32xf32>
    %17 = tpu.matmul %1, %2, %cst_14 {dimension_numbers = #tpu.dot_dimension_numbers<[1], [0], [0], [1], [0, 0, 1, 1], [], []>} : vector<16x32xf32>, vector<32x32xf32>, vector<16x32xf32> -> vector<16x32xf32>
    %18 = vector.broadcast %3 : vector<1x32xf32> to vector<16x32xf32>
    %19 = arith.addf %17, %18 : vector<16x32xf32>
    %cst_15 = arith.constant 0.000000e+00 : f32
    %20 = vector.broadcast %cst_15 : f32 to vector<16x32xf32>
    %21 = arith.maximumf %19, %20 : vector<16x32xf32>
    %cst_16 = arith.constant dense<0.000000e+00> : vector<16x32xf32>
    %22 = tpu.matmul %21, %4, %cst_16 {dimension_numbers = #tpu.dot_dimension_numbers<[1], [0], [0], [1], [0, 0, 1, 1], [], []>} : vector<16x32xf32>, vector<32x32xf32>, vector<16x32xf32> -> vector<16x32xf32>
    %23 = vector.broadcast %5 : vector<1x32xf32> to vector<16x32xf32>
    %24 = arith.addf %22, %23 : vector<16x32xf32>
    %cst_17 = arith.constant 0.000000e+00 : f32
    %25 = vector.broadcast %cst_17 : f32 to vector<16x32xf32>
    %26 = arith.maximumf %24, %25 : vector<16x32xf32>
    %27 = vector.shape_cast %26 : vector<16x32xf32> to vector<2x8x32xf32>
    "tpu.trace_start"() <{level = 10 : i32, message = "blh,bmh->blm"}> : () -> ()
    %cst_18 = arith.constant dense<0.000000e+00> : vector<2x8x8xf32>
    %28 = tpu.matmul %16, %27, %cst_18 {dimension_numbers = #tpu.dot_dimension_numbers<[2], [2], [1], [1], [0, 0, 0, 1, 1, 1], [0], [0]>} : vector<2x8x32xf32>, vector<2x8x32xf32>, vector<2x8x8xf32> -> vector<2x8x8xf32>
    "tpu.trace_stop"() : () -> ()
    "tpu.trace_start"() <{level = 10 : i32, message = "bmh,blh->bml"}> : () -> ()
    %cst_19 = arith.constant dense<0.000000e+00> : vector<2x8x8xf32>
    %29 = tpu.matmul %27, %16, %cst_19 {dimension_numbers = #tpu.dot_dimension_numbers<[2], [2], [1], [1], [0, 0, 0, 1, 1, 1], [0], [0]>} : vector<2x8x32xf32>, vector<2x8x32xf32>, vector<2x8x8xf32> -> vector<2x8x8xf32>
    "tpu.trace_stop"() : () -> ()
    %cst_20 = arith.constant dense<0xFF800000> : vector<2x8xf32>
    %30 = vector.multi_reduction <maximumf>, %28, %cst_20 [2] : vector<2x8x8xf32> to vector<2x8xf32>
    %31 = vector.shape_cast %30 : vector<2x8xf32> to vector<2x8x1xf32>
    %32 = vector.broadcast %31 : vector<2x8x1xf32> to vector<2x8x8xf32>
    %33 = arith.subf %28, %32 : vector<2x8x8xf32>
    %34 = math.exp %33 : vector<2x8x8xf32>
    %cst_21 = arith.constant dense<0.000000e+00> : vector<2x8xf32>
    %35 = vector.multi_reduction <add>, %34, %cst_21 [2] : vector<2x8x8xf32> to vector<2x8xf32>
    %36 = vector.shape_cast %35 : vector<2x8xf32> to vector<2x8x1xf32>
    %37 = tpu.reciprocal %36 {approx = true} : vector<2x8x1xf32> -> vector<2x8x1xf32>
    %38 = vector.broadcast %37 : vector<2x8x1xf32> to vector<2x8x8xf32>
    %39 = arith.mulf %34, %38 : vector<2x8x8xf32>
    %cst_22 = arith.constant dense<0xFF800000> : vector<2x8xf32>
    %40 = vector.multi_reduction <maximumf>, %29, %cst_22 [2] : vector<2x8x8xf32> to vector<2x8xf32>
    %41 = vector.shape_cast %40 : vector<2x8xf32> to vector<2x8x1xf32>
    %42 = vector.broadcast %41 : vector<2x8x1xf32> to vector<2x8x8xf32>
    %43 = arith.subf %29, %42 : vector<2x8x8xf32>
    %44 = math.exp %43 : vector<2x8x8xf32>
    %cst_23 = arith.constant dense<0.000000e+00> : vector<2x8xf32>
    %45 = vector.multi_reduction <add>, %44, %cst_23 [2] : vector<2x8x8xf32> to vector<2x8xf32>
    %46 = vector.shape_cast %45 : vector<2x8xf32> to vector<2x8x1xf32>
    %47 = tpu.reciprocal %46 {approx = true} : vector<2x8x1xf32> -> vector<2x8x1xf32>
    %48 = vector.broadcast %47 : vector<2x8x1xf32> to vector<2x8x8xf32>
    %49 = arith.mulf %44, %48 : vector<2x8x8xf32>
    %50 = vector.shape_cast %1 : vector<16x32xf32> to vector<2x8x32xf32>
    %51 = vector.shape_cast %0 : vector<16x32xf32> to vector<2x8x32xf32>
    %52 = arith.truncf %39 : vector<2x8x8xf32> to vector<2x8x8xbf16>
    %53 = arith.truncf %50 : vector<2x8x32xf32> to vector<2x8x32xbf16>
    "tpu.trace_start"() <{level = 10 : i32, message = "blm,bmd->bld"}> : () -> ()
    %cst_24 = arith.constant dense<0.000000e+00> : vector<2x8x32xf32>
    %54 = tpu.matmul %52, %53, %cst_24 {dimension_numbers = #tpu.dot_dimension_numbers<[2], [1], [1], [2], [0, 0, 0, 1, 1, 2], [0], [0]>} : vector<2x8x8xbf16>, vector<2x8x32xbf16>, vector<2x8x32xf32> -> vector<2x8x32xf32>
    "tpu.trace_stop"() : () -> ()
    %55 = arith.truncf %49 : vector<2x8x8xf32> to vector<2x8x8xbf16>
    %56 = arith.truncf %51 : vector<2x8x32xf32> to vector<2x8x32xbf16>
    "tpu.trace_start"() <{level = 10 : i32, message = "bml,bld->bmd"}> : () -> ()
    %cst_25 = arith.constant dense<0.000000e+00> : vector<2x8x32xf32>
    %57 = tpu.matmul %55, %56, %cst_25 {dimension_numbers = #tpu.dot_dimension_numbers<[2], [1], [1], [2], [0, 0, 0, 1, 1, 2], [0], [0]>} : vector<2x8x8xbf16>, vector<2x8x32xbf16>, vector<2x8x32xf32> -> vector<2x8x32xf32>
    "tpu.trace_stop"() : () -> ()
    %58 = vector.shape_cast %54 : vector<2x8x32xf32> to vector<16x32xf32>
    %c0_26 = arith.constant 0 : index
    %c0_27 = arith.constant 0 : index
    %59 = vector.load %arg7[%c0_26, %c0_27] : memref<16x32xf32, #tpu.memory_space<vmem>>, vector<16x32xf32>
    tpu.vector_store %arg7[%c0_26, %c0_27], %58 {strides = array<i32>} : memref<16x32xf32, #tpu.memory_space<vmem>>, vector<16x32xf32>,
    %60 = vector.shape_cast %57 : vector<2x8x32xf32> to vector<16x32xf32>
    %c0_28 = arith.constant 0 : index
    %c0_29 = arith.constant 0 : index
    %61 = vector.load %arg8[%c0_28, %c0_29] : memref<16x32xf32, #tpu.memory_space<vmem>>, vector<16x32xf32>
    tpu.vector_store %arg8[%c0_28, %c0_29], %60 {strides = array<i32>} : memref<16x32xf32, #tpu.memory_space<vmem>>, vector<16x32xf32>,
    return
  }
  func.func @transform_0(%arg0: i32) -> (i32, i32) {
    %c0_i32 = arith.constant 0 : i32
    %c0_i32_0 = arith.constant 0 : i32
    return %arg0, %c0_i32 : i32, i32
  }
  func.func @transform_1(%arg0: i32) -> (i32, i32) {
    %c0_i32 = arith.constant 0 : i32
    %c0_i32_0 = arith.constant 0 : i32
    return %arg0, %c0_i32 : i32, i32
  }
  func.func @transform_2(%arg0: i32) -> (i32, i32) {
    %c0_i32 = arith.constant 0 : i32
    %c0_i32_0 = arith.constant 0 : i32
    %c0_i32_1 = arith.constant 0 : i32
    return %c0_i32, %c0_i32_0 : i32, i32
  }
  func.func @transform_3(%arg0: i32) -> (i32, i32) {
    %c0_i32 = arith.constant 0 : i32
    %c0_i32_0 = arith.constant 0 : i32
    %c0_i32_1 = arith.constant 0 : i32
    return %c0_i32, %c0_i32_0 : i32, i32
  }
  func.func @transform_4(%arg0: i32) -> (i32, i32) {
    %c0_i32 = arith.constant 0 : i32
    %c0_i32_0 = arith.constant 0 : i32
    %c0_i32_1 = arith.constant 0 : i32
    return %c0_i32, %c0_i32_0 : i32, i32
  }
  func.func @transform_5(%arg0: i32) -> (i32, i32) {
    %c0_i32 = arith.constant 0 : i32
    %c0_i32_0 = arith.constant 0 : i32
    %c0_i32_1 = arith.constant 0 : i32
    return %c0_i32, %c0_i32_0 : i32, i32
  }
  func.func @transform_6(%arg0: i32) -> (i32, i32) {
    %c0_i32 = arith.constant 0 : i32
    %c0_i32_0 = arith.constant 0 : i32
    return %arg0, %c0_i32 : i32, i32
  }
  func.func @transform_7(%arg0: i32) -> (i32, i32) {
    %c0_i32 = arith.constant 0 : i32
    %c0_i32_0 = arith.constant 0 : i32
    return %arg0, %c0_i32 : i32, i32
  }
}

</mosaic_0001>

<llo_original>
// kernel: tpu_custom_call.1
$region0: #{tpu_custom_call.1}
  #allocation0 [shape = 'u32[]', space=smem, size = 0x4, offset = 0x4, fixed_abs, tag = 'smem constant byte address 0x4 - core index']
  #allocation1 [shape = 'u32[72,128]{1,0:T(1,128)}', space=vmem, size = 0x9000, scoped, tag = 'internal scratch']
  %s0 = inlined_call_operand.hbm [shape: f32[32,32], index: 0, kind: input, shape index: {}]
  %s1 = inlined_call_operand.hbm [shape: f32[32,32], index: 1, kind: input, shape index: {}]
  %s2 = inlined_call_operand.hbm [shape: f32[32,32], index: 2, kind: input, shape index: {}]
  %s3 = inlined_call_operand.vmem [shape: f32[1,32], index: 3, kind: input, shape index: {}]
  %s4 = inlined_call_operand.hbm [shape: f32[32,32], index: 4, kind: input, shape index: {}]
  %s5 = inlined_call_operand.vmem [shape: f32[1,32], index: 5, kind: input, shape index: {}]
  %s6 = inlined_call_operand.hbm [shape: f32[32,32], index: 6, kind: output, shape index: {0}]
  %s7 = inlined_call_operand.hbm [shape: f32[32,32], index: 7, kind: output, shape index: {1}]
  %8 = xla_tuple %s6, %s7
  %s9 = sld [smem:[#allocation0]]
  $region81: #{tpu_custom_call.1} parent=0
    _
  %s11 = ssub.s32 1, %s9
  %s12 = scalar_select 0, %s11, %s9
  $region1: #{tpu_custom_call.1} parent=0
    #allocation2 [shape = 'u8[16384]{0}', space=vmem, size = 0x4000, scoped, tag = 'input window, operand 0']
    #allocation3 [shape = 's32[2]{0}', space=sflag, size = 0x8, scoped, tag = 'scoped memory for tpu_custom_call.1']
    #allocation4 [shape = 's32[2]{0}', space=sflag, size = 0x8, scoped, tag = 'scoped memory for tpu_custom_call.1']
    #allocation5 [shape = 'u8[16384]{0}', space=vmem, size = 0x4000, scoped, tag = 'input window, operand 1']
    #allocation6 [shape = 's32[2]{0}', space=sflag, size = 0x8, scoped, tag = 'scoped memory for tpu_custom_call.1']
    #allocation7 [shape = 'u8[16384]{0}', space=vmem, size = 0x4000, scoped, tag = 'input window, operand 2, single buffered']
    #allocation8 [shape = 'u8[16384]{0}', space=vmem, size = 0x4000, scoped, tag = 'input window, operand 4, single buffered']
    #allocation9 [shape = 's32[1]{0}', space=sflag, size = 0x4, scoped, tag = 'scoped memory for tpu_custom_call.1']
    #allocation10 [shape = 'u8[16384]{0}', space=vmem, size = 0x4000, scoped, tag = 'output window, operand 0']
    #allocation11 [shape = 'u8[16384]{0}', space=vmem, size = 0x4000, scoped, tag = 'output window, operand 1']
    #allocation12 [shape = 's32[2]{0}', space=sflag, size = 0x8, scoped, tag = 'scoped memory for tpu_custom_call.1']
    %13 = vsyncpa [#allocation3], 0
    %s14 = scalar_lea.sflag [#allocation3], 1
    %15 = vsyncpa %s14, 0
    %16 = vsyncpa [#allocation6], 0
    %s17 = scalar_lea.sflag [#allocation6], 1
    %18 = vsyncpa %s17, 0
    %19 = vsyncpa [#allocation9], 0
    %20 = vsyncpa [#allocation4], 0
    %s21 = scalar_lea.sflag [#allocation4], 1
    %22 = vsyncpa %s21, 0
    %23 = vsyncpa [#allocation12], 0
    %s24 = scalar_lea.sflag [#allocation12], 1
    %25 = vsyncpa %s24, 0
    loop: start=0, step=1, limit=4
    $region2: #{tpu_custom_call.1} parent=1 // loop_pre_header
      _
    $region3: #{tpu_custom_call.1} parent=1 // loop_header
      %s27 = sphi 0, %s31
      %p28 = scmp.ge.s32.totalorder %s27, 4
      %s37 = sphi 0, %s39
      %s40 = sphi 0, %s37
      %s41 = sphi 0, %s40
      %s57 = sphi 0, %s41
      %s63 = sphi 0, %s65
      %s66 = sphi 0, %s63
      %s67 = sphi 0, %s66
      %s83 = sphi 0, %s67
      %s87 = sphi 0, %s87
      %s89 = sphi 0, %s87
      %s90 = sphi 0, %s89
      %s104 = sphi 0, %s90
      %s108 = sphi 0, %s108
      %s110 = sphi 0, %s108
      %s111 = sphi 0, %s110
      %s125 = sphi 0, %s111
      %s129 = sphi 0, %s129
      %s131 = sphi 0, %s129
      %s132 = sphi 0, %s131
      %s146 = sphi 0, %s132
      %s150 = sphi 0, %s150
      %s152 = sphi 0, %s150
      %s153 = sphi 0, %s152
      %s167 = sphi 0, %s153
      %s173 = sphi 0, %s175
      %s176 = sphi 0, %s173
      %s177 = sphi 0, %s176
      %s193 = sphi 0, %s177
      %s199 = sphi 0, %s201
      %s202 = sphi 0, %s199
      %s203 = sphi 0, %s202
      %s219 = sphi 0, %s203
    $region4: #{tpu_custom_call.1} parent=1 // loop_header_branch
      %30 = sbr.rel (%p28) target = $region8
    $region5: #{tpu_custom_call.1} parent=1 // loop_body
      %s32 = ssub.s32 %s27, 1
      %s33 = ssub.s32 %s27, 2
      %s34 = sadd.s32 %s27, 1
      %s35 = ssub.s32 %s27, %s34
      %p36 = scmp.eq.s32.totalorder %s35, 0
      %s38 = sadd.s32 %s37, 1
      %s39 = scalar_select %p36, %s37, %s38
      %p42 = pneg %p36
      %p43 = scmp.eq.s32.totalorder %s27, 1
      %p44 = por %p42, %p43
      %p45 = scmp.ne.s32.totalorder %s37, %s40
      %p46 = scmp.eq.s32.totalorder %s27, 0
      %p47 = por %p45, %p46
      %p48 = scmp.ne.s32.totalorder %s37, %s40
      %p49 = scmp.eq.s32.totalorder %s32, 1
      %p50 = por %p48, %p49
      %p51 = scmp.ne.s32.totalorder %s40, %s41
      %p52 = scmp.eq.s32.totalorder %s32, 0
      %p53 = por %p51, %p52
      %p54 = scmp.ne.s32.totalorder %s40, %s41
      %p55 = scmp.eq.s32.totalorder %s33, 1
      %p56 = por %p54, %p55
      %p58 = scmp.ne.s32.totalorder %s41, %s57
      %p59 = scmp.eq.s32.totalorder %s33, 0
      %p60 = por %p58, %p59
      %s61 = ssub.s32 %s27, %s34
      %p62 = scmp.eq.s32.totalorder %s61, 0
      %s64 = sadd.s32 %s63, 1
      %s65 = scalar_select %p62, %s63, %s64
      %p68 = pneg %p62
      %p69 = scmp.eq.s32.totalorder %s27, 1
      %p70 = por %p68, %p69
      %p71 = scmp.ne.s32.totalorder %s63, %s66
      %p72 = scmp.eq.s32.totalorder %s27, 0
      %p73 = por %p71, %p72
      %p74 = scmp.ne.s32.totalorder %s63, %s66
      %p75 = scmp.eq.s32.totalorder %s32, 1
      %p76 = por %p74, %p75
      %p77 = scmp.ne.s32.totalorder %s66, %s67
      %p78 = scmp.eq.s32.totalorder %s32, 0
      %p79 = por %p77, %p78
      %p80 = scmp.ne.s32.totalorder %s66, %s67
      %p81 = scmp.eq.s32.totalorder %s33, 1
      %p82 = por %p80, %p81
      %p84 = scmp.ne.s32.totalorder %s67, %s83
      %p85 = scmp.eq.s32.totalorder %s33, 0
      %p86 = por %p84, %p85
      %s88 = sadd.s32 %s87, 1
      %p91 = scmp.eq.s32.totalorder %s27, 1
      %p92 = scmp.ne.s32.totalorder %s87, %s89
      %p93 = scmp.eq.s32.totalorder %s27, 0
      %p94 = por %p92, %p93
      %p95 = scmp.ne.s32.totalorder %s87, %s89
      %p96 = scmp.eq.s32.totalorder %s32, 1
      %p97 = por %p95, %p96
      %p98 = scmp.ne.s32.totalorder %s89, %s90
      %p99 = scmp.eq.s32.totalorder %s32, 0
      %p100 = por %p98, %p99
      %p101 = scmp.ne.s32.totalorder %s89, %s90
      %p102 = scmp.eq.s32.totalorder %s33, 1
      %p103 = por %p101, %p102
      %p105 = scmp.ne.s32.totalorder %s90, %s104
      %p106 = scmp.eq.s32.totalorder %s33, 0
      %p107 = por %p105, %p106
      %s109 = sadd.s32 %s108, 1
      %p112 = scmp.eq.s32.totalorder %s27, 1
      %p113 = scmp.ne.s32.totalorder %s108, %s110
      %p114 = scmp.eq.s32.totalorder %s27, 0
      %p115 = por %p113, %p114
      %p116 = scmp.ne.s32.totalorder %s108, %s110
      %p117 = scmp.eq.s32.totalorder %s32, 1
      %p118 = por %p116, %p117
      %p119 = scmp.ne.s32.totalorder %s110, %s111
      %p120 = scmp.eq.s32.totalorder %s32, 0
      %p121 = por %p119, %p120
      %p122 = scmp.ne.s32.totalorder %s110, %s111
      %p123 = scmp.eq.s32.totalorder %s33, 1
      %p124 = por %p122, %p123
      %p126 = scmp.ne.s32.totalorder %s111, %s125
      %p127 = scmp.eq.s32.totalorder %s33, 0
      %p128 = por %p126, %p127
      %s130 = sadd.s32 %s129, 1
      %p133 = scmp.eq.s32.totalorder %s27, 1
      %p134 = scmp.ne.s32.totalorder %s129, %s131
      %p135 = scmp.eq.s32.totalorder %s27, 0
      %p136 = por %p134, %p135
      %p137 = scmp.ne.s32.totalorder %s129, %s131
      %p138 = scmp.eq.s32.totalorder %s32, 1
      %p139 = por %p137, %p138
      %p140 = scmp.ne.s32.totalorder %s131, %s132
      %p141 = scmp.eq.s32.totalorder %s32, 0
      %p142 = por %p140, %p141
      %p143 = scmp.ne.s32.totalorder %s131, %s132
      %p144 = scmp.eq.s32.totalorder %s33, 1
      %p145 = por %p143, %p144
      %p147 = scmp.ne.s32.totalorder %s132, %s146
      %p148 = scmp.eq.s32.totalorder %s33, 0
      %p149 = por %p147, %p148
      %s151 = sadd.s32 %s150, 1
      %p154 = scmp.eq.s32.totalorder %s27, 1
      %p155 = scmp.ne.s32.totalorder %s150, %s152
      %p156 = scmp.eq.s32.totalorder %s27, 0
      %p157 = por %p155, %p156
      %p158 = scmp.ne.s32.totalorder %s150, %s152
      %p159 = scmp.eq.s32.totalorder %s32, 1
      %p160 = por %p158, %p159
      %p161 = scmp.ne.s32.totalorder %s152, %s153
      %p162 = scmp.eq.s32.totalorder %s32, 0
      %p163 = por %p161, %p162
      %p164 = scmp.ne.s32.totalorder %s152, %s153
      %p165 = scmp.eq.s32.totalorder %s33, 1
      %p166 = por %p164, %p165
      %p168 = scmp.ne.s32.totalorder %s153, %s167
      %p169 = scmp.eq.s32.totalorder %s33, 0
      %p170 = por %p168, %p169
      %s171 = ssub.s32 %s27, %s34
      %p172 = scmp.eq.s32.totalorder %s171, 0
      %s174 = sadd.s32 %s173, 1
      %s175 = scalar_select %p172, %s173, %s174
      %p178 = pneg %p172
      %p179 = scmp.eq.s32.totalorder %s27, 1
      %p180 = por %p178, %p179
      %p181 = scmp.ne.s32.totalorder %s173, %s176
      %p182 = scmp.eq.s32.totalorder %s27, 0
      %p183 = por %p181, %p182
      %p184 = scmp.ne.s32.totalorder %s173, %s176
      %p185 = scmp.eq.s32.totalorder %s32, 1
      %p186 = por %p184, %p185
      %p187 = scmp.ne.s32.totalorder %s176, %s177
      %p188 = scmp.eq.s32.totalorder %s32, 0
      %p189 = por %p187, %p188
      %p190 = scmp.ne.s32.totalorder %s176, %s177
      %p191 = scmp.eq.s32.totalorder %s33, 1
      %p192 = por %p190, %p191
      %p194 = scmp.ne.s32.totalorder %s177, %s193
      %p195 = scmp.eq.s32.totalorder %s33, 0
      %p196 = por %p194, %p195
      %s197 = ssub.s32 %s27, %s34
      %p198 = scmp.eq.s32.totalorder %s197, 0
      %s200 = sadd.s32 %s199, 1
      %s201 = scalar_select %p198, %s199, %s200
      %p204 = pneg %p198
      %p205 = scmp.eq.s32.totalorder %s27, 1
      %p206 = por %p204, %p205
      %p207 = scmp.ne.s32.totalorder %s199, %s202
      %p208 = scmp.eq.s32.totalorder %s27, 0
      %p209 = por %p207, %p208
      %p210 = scmp.ne.s32.totalorder %s199, %s202
      %p211 = scmp.eq.s32.totalorder %s32, 1
      %p212 = por %p210, %p211
      %p213 = scmp.ne.s32.totalorder %s202, %s203
      %p214 = scmp.eq.s32.totalorder %s32, 0
      %p215 = por %p213, %p214
      %p216 = scmp.ne.s32.totalorder %s202, %s203
      %p217 = scmp.eq.s32.totalorder %s33, 1
      %p218 = por %p216, %p217
      %p220 = scmp.ne.s32.totalorder %s203, %s219
      %p221 = scmp.eq.s32.totalorder %s33, 0
      %p222 = por %p220, %p221
      %p223 = scmp.le.s32.totalorder 1, %s27
      %p224 = scmp.lt.s32.totalorder %s27, 3
      %p225 = pnand %p223, %p224
      %p226 = pneg %p225
      // Predicated region
      $region9: #{tpu_custom_call.1} parent=5 // pred_check
        _
      $region10: #{tpu_custom_call.1} parent=5 // pred_check_branch
        %228 = sbr.rel (%p225) target = $region12
      $region11: #{tpu_custom_call.1} parent=5 // pred_region
        %s229 = ssub.s32 %s27, 1
        // Predicated region
        $region13: #{tpu_custom_call.1} parent=11 // pred_check
          %p230 = pneg %p100
        $region14: #{tpu_custom_call.1} parent=11 // pred_check_branch
          %232 = sbr.rel (%p230) target = $region16
        $region15: #{tpu_custom_call.1} parent=11 // pred_region
          %234 = vsyncadd [#allocation6], 0
          %s235 = sshll.u32 %s2, 4
          %s236 = int_to_ptr.hbm [resolvable:$true] %s235
          %s237 = sshll.u32 [#allocation7], 4
          %s238 = int_to_ptr.vmem [resolvable:$true] %s237
          %243 = dma.hbm_to_vmem [thread:$0]  %s236, 512, %s238, [#allocation6], 128, 128, 8
        $region16: #{tpu_custom_call.1} parent=11 // pred_fallthru
          _
        // Predicated region
        $region17: #{tpu_custom_call.1} parent=11 // pred_check
          %p244 = pneg %p121
        $region18: #{tpu_custom_call.1} parent=11 // pred_check_branch
          %246 = sbr.rel (%p244) target = $region20
        $region19: #{tpu_custom_call.1} parent=11 // pred_region
          _
        $region20: #{tpu_custom_call.1} parent=11 // pred_fallthru
          _
        // Predicated region
        $region21: #{tpu_custom_call.1} parent=11 // pred_check
          %p247 = pneg %p142
        $region22: #{tpu_custom_call.1} parent=11 // pred_check_branch
          %249 = sbr.rel (%p247) target = $region24
        $region23: #{tpu_custom_call.1} parent=11 // pred_region
          %251 = vsyncadd [#allocation9], 0
          %s252 = sshll.u32 %s4, 4
          %s253 = int_to_ptr.hbm [resolvable:$true] %s252
          %s254 = sshll.u32 [#allocation8], 4
          %s255 = int_to_ptr.vmem [resolvable:$true] %s254
          %260 = dma.hbm_to_vmem [thread:$0]  %s253, 512, %s255, [#allocation9], 128, 128, 8
        $region24: #{tpu_custom_call.1} parent=11 // pred_fallthru
          _
        // Predicated region
        $region25: #{tpu_custom_call.1} parent=11 // pred_check
          %p261 = pneg %p163
        $region26: #{tpu_custom_call.1} parent=11 // pred_check_branch
          %263 = sbr.rel (%p261) target = $region28
        $region27: #{tpu_custom_call.1} parent=11 // pred_region
          _
        $region28: #{tpu_custom_call.1} parent=11 // pred_fallthru
          _
      $region12: #{tpu_custom_call.1} parent=5 // pred_fallthru
        _
      %p264 = scmp.lt.s32.totalorder %s27, 2
      // Predicated region
      $region29: #{tpu_custom_call.1} parent=5 // pred_check
        %p265 = pneg %p264
      $region30: #{tpu_custom_call.1} parent=5 // pred_check_branch
        %267 = sbr.rel (%p265) target = $region32
      $region31: #{tpu_custom_call.1} parent=5 // pred_region
        // Predicated region
        $region33: #{tpu_custom_call.1} parent=31 // pred_check
          %p268 = pneg %p47
        $region34: #{tpu_custom_call.1} parent=31 // pred_check_branch
          %270 = sbr.rel (%p268) target = $region36
        $region35: #{tpu_custom_call.1} parent=31 // pred_region
          %s271 = sand.u32 %s37, 1
          %s272 = scalar_lea.sflag [#allocation3], %s271
          %s273 = sand.u32 %s37, 1
          %s274 = smul.addr %s273, 16
          %s275 = scalar_lea.vmem [#allocation2], %s274
          %s276 = smul.u32 2, %s27
          %278 = vsyncadd %s272, 0
          %s279 = smul.addr %s276, 8
          %s280 = scalar_lea.hbm %s0, %s279
          %s281 = sshll.u32 %s280, 4
          %s282 = int_to_ptr.hbm [resolvable:$true] %s281
          %s283 = sshll.u32 %s275, 4
          %s284 = int_to_ptr.vmem [resolvable:$true] %s283
          %289 = dma.hbm_to_vmem [thread:$0]  %s282, 256, %s284, %s272, 128, 128, 8
        $region36: #{tpu_custom_call.1} parent=31 // pred_fallthru
          _
        // Predicated region
        $region37: #{tpu_custom_call.1} parent=31 // pred_check
          %p290 = pneg %p73
        $region38: #{tpu_custom_call.1} parent=31 // pred_check_branch
          %292 = sbr.rel (%p290) target = $region40
        $region39: #{tpu_custom_call.1} parent=31 // pred_region
          %s293 = sand.u32 %s27, 1
          %s294 = scalar_lea.sflag [#allocation6], %s293
          %s295 = sand.u32 %s63, 1
          %s296 = smul.addr %s295, 16
          %s297 = scalar_lea.vmem [#allocation5], %s296
          %s298 = smul.u32 2, %s27
          %300 = vsyncadd %s294, 0
          %s301 = smul.addr %s298, 8
          %s302 = scalar_lea.hbm %s1, %s301
          %s303 = sshll.u32 %s302, 4
          %s304 = int_to_ptr.hbm [resolvable:$true] %s303
          %s305 = sshll.u32 %s297, 4
          %s306 = int_to_ptr.vmem [resolvable:$true] %s305
          %311 = dma.hbm_to_vmem [thread:$0]  %s304, 256, %s306, %s294, 128, 128, 8
        $region40: #{tpu_custom_call.1} parent=31 // pred_fallthru
          _
      $region32: #{tpu_custom_call.1} parent=5 // pred_fallthru
        _
      %p312 = scmp.le.s32.totalorder 1, %s27
      %p313 = scmp.lt.s32.totalorder %s27, 3
      %p314 = pnand %p312, %p313
      %p315 = pneg %p314
      // Predicated region
      $region41: #{tpu_custom_call.1} parent=5 // pred_check
        _
      $region42: #{tpu_custom_call.1} parent=5 // pred_check_branch
        %317 = sbr.rel (%p314) target = $region44
      $region43: #{tpu_custom_call.1} parent=5 // pred_region
        %s318 = ssub.s32 %s27, 1
        %s319 = sand.u32 %s40, 1
        %s320 = scalar_lea.sflag [#allocation3], %s319
        %s321 = sand.u32 %s40, 1
        %s322 = smul.addr %s321, 16
        %s323 = scalar_lea.vmem [#allocation2], %s322
        // Predicated region
        $region45: #{tpu_custom_call.1} parent=43 // pred_check
          %p324 = pneg %p53
        $region46: #{tpu_custom_call.1} parent=43 // pred_check_branch
          %326 = sbr.rel (%p324) target = $region48
        $region47: #{tpu_custom_call.1} parent=43 // pred_region
          %328 = dma.done %s320, 256
        $region48: #{tpu_custom_call.1} parent=43 // pred_fallthru
          _
        %s329 = sand.u32 %s32, 1
        %s330 = scalar_lea.sflag [#allocation6], %s329
        %s331 = sand.u32 %s66, 1
        %s332 = smul.addr %s331, 16
        %s333 = scalar_lea.vmem [#allocation5], %s332
        // Predicated region
        $region49: #{tpu_custom_call.1} parent=43 // pred_check
          %p334 = pneg %p79
        $region50: #{tpu_custom_call.1} parent=43 // pred_check_branch
          %336 = sbr.rel (%p334) target = $region52
        $region51: #{tpu_custom_call.1} parent=43 // pred_region
          %338 = dma.done %s330, 256
        $region52: #{tpu_custom_call.1} parent=43 // pred_fallthru
          _
        // Predicated region
        $region53: #{tpu_custom_call.1} parent=43 // pred_check
          %p339 = pneg %p100
        $region54: #{tpu_custom_call.1} parent=43 // pred_check_branch
          %341 = sbr.rel (%p339) target = $region56
        $region55: #{tpu_custom_call.1} parent=43 // pred_region
          %343 = dma.done [#allocation6], 512
        $region56: #{tpu_custom_call.1} parent=43 // pred_fallthru
          _
        // Predicated region
        $region57: #{tpu_custom_call.1} parent=43 // pred_check
          %p344 = pneg %p142
        $region58: #{tpu_custom_call.1} parent=43 // pred_check_branch
          %346 = sbr.rel (%p344) target = $region60
        $region59: #{tpu_custom_call.1} parent=43 // pred_region
          %348 = dma.done [#allocation9], 512
        $region60: #{tpu_custom_call.1} parent=43 // pred_fallthru
          _
        %s349 = sand.u32 %s40, 1
        %s350 = scalar_lea.sflag [#allocation3], %s349
        %s351 = sand.u32 %s40, 1
        %s352 = smul.addr %s351, 16
        %s353 = scalar_lea.vmem [#allocation2], %s352
        %p354 = pneg %p53
        %p355 = pneg %p50
        %s356 = sand.u32 %s32, 1
        %s357 = scalar_lea.sflag [#allocation6], %s356
        %s358 = sand.u32 %s66, 1
        %s359 = smul.addr %s358, 16
        %s360 = scalar_lea.vmem [#allocation5], %s359
        %p361 = pneg %p79
        %p362 = pneg %p76
        %p363 = pneg %p100
        %p364 = pneg %p97
        %p365 = pneg %p121
        %p366 = pneg %p118
        %p367 = pneg %p142
        %p368 = pneg %p139
        %p369 = pneg %p163
        %p370 = pneg %p160
        %p371 = pneg %p189
        %p372 = pneg %p186
        %s373 = sand.u32 %s176, 1
        %s374 = scalar_lea.sflag [#allocation4], %s373
        %s375 = sand.u32 %s176, 1
        %s376 = smul.addr %s375, 16
        %s377 = scalar_lea.vmem [#allocation10], %s376
        %p378 = pneg %p215
        %p379 = pneg %p212
        %s380 = sand.u32 %s202, 1
        %s381 = scalar_lea.sflag [#allocation12], %s380
        %s382 = sand.u32 %s202, 1
        %s383 = smul.addr %s382, 16
        %s384 = scalar_lea.vmem [#allocation11], %s383
        %s385 = smul.u32 2, %s32
        %s386 = smul.u32 2, %s32
        %s387 = smul.u32 2, %s32
        %s388 = smul.u32 2, %s32
        %v390 = vld [vmem:[%s323] sm:$0xff]
        %v391 = vld [vmem:[%s323 + $0x8] sm:$0xff]
        %v392 = vld [vmem:[%s333] sm:$0xff]
        %v393 = vld [vmem:[%s333 + $0x8] sm:$0xff]
        %v394 = vld [vmem:[#allocation7] sm:$0xff]
        %v395 = vld [vmem:[#allocation7 + $0x8] sm:$0xff]
        %v396 = vld [vmem:[#allocation7 + $0x10] sm:$0xff]
        %v397 = vld [vmem:[#allocation7 + $0x18] sm:$0xff]
        %v398 = vld [vmem:[%s3] sm:$0x1]
        %v399 = vld [vmem:[#allocation8] sm:$0xff]
        %v400 = vld [vmem:[#allocation8 + $0x8] sm:$0xff]
        %v401 = vld [vmem:[#allocation8 + $0x10] sm:$0xff]
        %v402 = vld [vmem:[#allocation8 + $0x18] sm:$0xff]
        %v403 = vld [vmem:[%s5] sm:$0x1]
        %v405 = vperm.slane %v398, 0
        %vm407 = vcmask 261120
        %v409 = vsel %vm407, %v390, 0
        %v412 = vsel %vm407, %v391, 0
        %414 = vmatpush.msra.mxu0 0.0
        %415 = vmatpush.msra.mxu0 0.0
        %416 = vmatpush.msra.mxu0 0.0
        %417 = vmatpush.msra.mxu0 0.0
        %418 = vmatpush.msra.mxu0 0.0
        %419 = vmatpush.msra.mxu0 0.0
        %420 = vmatpush.msra.mxu0 0.0
        %421 = vmatpush.msra.mxu0 0.0
        %422 = vmatpush.msra.mxu0 0.0
        %423 = vmatpush.msra.mxu0 0.0
        %424 = vmatpush.msra.mxu0 0.0
        %425 = vmatpush.msra.mxu0 0.0
        %426 = vmatpush.msra.mxu0 %v397
        %427 = vmatpush.msra.mxu0 %v396
        %428 = vmatpush.msra.mxu0 %v395
        %429 = vmatpush.msra.mxu0 %v394
        %430 = vmatmul.f32.gmra.mxu0 %v409
        %v431 = vpop.f32.mrf.mxu0
        %v432 = vadd.f32 %v405, %v431
        %433 = vmatmul.f32.gmra.mxu0 %v412
        %v434 = vpop.f32.mrf.mxu0
        %v435 = vadd.f32 %v405, %v434
        %436 = vdwg.mxu0
        %v437 = vmax.f32 %v432, 0.0
        %v438 = vmax.f32 %v435, 0.0
        %v440 = vperm.slane %v403, 0
        %v443 = vsel %vm407, %v437, 0
        %v446 = vsel %vm407, %v438, 0
        %448 = vmatpush.msra.mxu0 0.0
        %449 = vmatpush.msra.mxu0 0.0
        %450 = vmatpush.msra.mxu0 0.0
        %451 = vmatpush.msra.mxu0 0.0
        %452 = vmatpush.msra.mxu0 0.0
        %453 = vmatpush.msra.mxu0 0.0
        %454 = vmatpush.msra.mxu0 0.0
        %455 = vmatpush.msra.mxu0 0.0
        %456 = vmatpush.msra.mxu0 0.0
        %457 = vmatpush.msra.mxu0 0.0
        %458 = vmatpush.msra.mxu0 0.0
        %459 = vmatpush.msra.mxu0 0.0
        %460 = vmatpush.msra.mxu0 %v402
        %461 = vmatpush.msra.mxu0 %v401
        %462 = vmatpush.msra.mxu0 %v400
        %463 = vmatpush.msra.mxu0 %v399
        %464 = vmatmul.f32.gmra.mxu0 %v443
        %v465 = vpop.f32.mrf.mxu0
        %v466 = vadd.f32 %v440, %v465
        %467 = vmatmul.f32.gmra.mxu0 %v446
        %v468 = vpop.f32.mrf.mxu0
        %v469 = vadd.f32 %v440, %v468
        %470 = vdwg.mxu0
        %v471 = vmax.f32 %v466, 0.0
        %v472 = vmax.f32 %v469, 0.0
        %v474 = vsel %vm407, %v392, 0
        %v477 = vsel %vm407, %v393, 0
        %479 = vmatpush.msra.mxu0 0.0
        %480 = vmatpush.msra.mxu0 0.0
        %481 = vmatpush.msra.mxu0 0.0
        %482 = vmatpush.msra.mxu0 0.0
        %483 = vmatpush.msra.mxu0 0.0
        %484 = vmatpush.msra.mxu0 0.0
        %485 = vmatpush.msra.mxu0 0.0
        %486 = vmatpush.msra.mxu0 0.0
        %487 = vmatpush.msra.mxu0 0.0
        %488 = vmatpush.msra.mxu0 0.0
        %489 = vmatpush.msra.mxu0 0.0
        %490 = vmatpush.msra.mxu0 0.0
        %491 = vmatpush.msra.mxu0 %v397
        %492 = vmatpush.msra.mxu0 %v396
        %493 = vmatpush.msra.mxu0 %v395
        %494 = vmatpush.msra.mxu0 %v394
        %495 = vmatmul.f32.gmra.mxu0 %v474
        %v496 = vpop.f32.mrf.mxu0
        %v497 = vadd.f32 %v405, %v496
        %498 = vmatmul.f32.gmra.mxu0 %v477
        %v499 = vpop.f32.mrf.mxu0
        %v500 = vadd.f32 %v405, %v499
        %501 = vdwg.mxu0
        %v502 = vmax.f32 %v497, 0.0
        %v503 = vmax.f32 %v500, 0.0
        %v505 = vsel %vm407, %v502, 0
        %v508 = vsel %vm407, %v503, 0
        %510 = vmatpush.msra.mxu0 0.0
        %511 = vmatpush.msra.mxu0 0.0
        %512 = vmatpush.msra.mxu0 0.0
        %513 = vmatpush.msra.mxu0 0.0
        %514 = vmatpush.msra.mxu0 0.0
        %515 = vmatpush.msra.mxu0 0.0
        %516 = vmatpush.msra.mxu0 0.0
        %517 = vmatpush.msra.mxu0 0.0
        %518 = vmatpush.msra.mxu0 0.0
        %519 = vmatpush.msra.mxu0 0.0
        %520 = vmatpush.msra.mxu0 0.0
        %521 = vmatpush.msra.mxu0 0.0
        %522 = vmatpush.msra.mxu0 %v402
        %523 = vmatpush.msra.mxu0 %v401
        %524 = vmatpush.msra.mxu0 %v400
        %525 = vmatpush.msra.mxu0 %v399
        %526 = vmatmul.f32.gmra.mxu0 %v505
        %v527 = vpop.f32.mrf.mxu0
        %v528 = vadd.f32 %v440, %v527
        %529 = vmatmul.f32.gmra.mxu0 %v508
        %v530 = vpop.f32.mrf.mxu0
        %v531 = vadd.f32 %v440, %v530
        %532 = vdwg.mxu0
        %v533 = vmax.f32 %v528, 0.0
        %v534 = vmax.f32 %v531, 0.0
        %v536 = vsel %vm407, %v471, 0
        %v539 = vsel %vm407, %v533, 0
        %541 = vmatpush.xpose.msra.mxu0 0.0
        %542 = vmatpush.xpose.msra.mxu0 0.0
        %543 = vmatpush.xpose.msra.mxu0 0.0
        %544 = vmatpush.xpose.msra.mxu0 0.0
        %545 = vmatpush.xpose.msra.mxu0 0.0
        %546 = vmatpush.xpose.msra.mxu0 0.0
        %547 = vmatpush.xpose.msra.mxu0 0.0
        %548 = vmatpush.xpose.msra.mxu0 0.0
        %549 = vmatpush.xpose.msra.mxu0 0.0
        %550 = vmatpush.xpose.msra.mxu0 0.0
        %551 = vmatpush.xpose.msra.mxu0 0.0
        %552 = vmatpush.xpose.msra.mxu0 0.0
        %553 = vmatpush.xpose.msra.mxu0 0.0
        %554 = vmatpush.xpose.msra.mxu0 0.0
        %555 = vmatpush.xpose.msra.mxu0 0.0
        %556 = vmatpush.xpose.msra.mxu0 %v539
        %557 = vmatmul.f32.gmra.mxu0 %v536
        %v558 = vpop.f32.mrf.mxu0
        %v559 = vadd.f32 0.0, %v558
        %560 = vdwg.mxu0
        %v562 = vsel %vm407, %v472, 0
        %v565 = vsel %vm407, %v534, 0
        %567 = vmatpush.xpose.msra.mxu0 0.0
        %568 = vmatpush.xpose.msra.mxu0 0.0
        %569 = vmatpush.xpose.msra.mxu0 0.0
        %570 = vmatpush.xpose.msra.mxu0 0.0
        %571 = vmatpush.xpose.msra.mxu0 0.0
        %572 = vmatpush.xpose.msra.mxu0 0.0
        %573 = vmatpush.xpose.msra.mxu0 0.0
        %574 = vmatpush.xpose.msra.mxu0 0.0
        %575 = vmatpush.xpose.msra.mxu0 0.0
        %576 = vmatpush.xpose.msra.mxu0 0.0
        %577 = vmatpush.xpose.msra.mxu0 0.0
        %578 = vmatpush.xpose.msra.mxu0 0.0
        %579 = vmatpush.xpose.msra.mxu0 0.0
        %580 = vmatpush.xpose.msra.mxu0 0.0
        %581 = vmatpush.xpose.msra.mxu0 0.0
        %582 = vmatpush.xpose.msra.mxu0 %v565
        %583 = vmatmul.f32.gmra.mxu0 %v562
        %v584 = vpop.f32.mrf.mxu0
        %v585 = vadd.f32 0.0, %v584
        %586 = vdwg.mxu0
        %587 = vmatpush.xpose.msra.mxu0 0.0
        %588 = vmatpush.xpose.msra.mxu0 0.0
        %589 = vmatpush.xpose.msra.mxu0 0.0
        %590 = vmatpush.xpose.msra.mxu0 0.0
        %591 = vmatpush.xpose.msra.mxu0 0.0
        %592 = vmatpush.xpose.msra.mxu0 0.0
        %593 = vmatpush.xpose.msra.mxu0 0.0
        %594 = vmatpush.xpose.msra.mxu0 0.0
        %595 = vmatpush.xpose.msra.mxu0 0.0
        %596 = vmatpush.xpose.msra.mxu0 0.0
        %597 = vmatpush.xpose.msra.mxu0 0.0
        %598 = vmatpush.xpose.msra.mxu0 0.0
        %599 = vmatpush.xpose.msra.mxu0 0.0
        %600 = vmatpush.xpose.msra.mxu0 0.0
        %601 = vmatpush.xpose.msra.mxu0 0.0
        %602 = vmatpush.xpose.msra.mxu0 %v536
        %603 = vmatmul.f32.gmra.mxu0 %v539
        %v604 = vpop.f32.mrf.mxu0
        %v605 = vadd.f32 0.0, %v604
        %606 = vdwg.mxu0
        %607 = vmatpush.xpose.msra.mxu0 0.0
        %608 = vmatpush.xpose.msra.mxu0 0.0
        %609 = vmatpush.xpose.msra.mxu0 0.0
        %610 = vmatpush.xpose.msra.mxu0 0.0
        %611 = vmatpush.xpose.msra.mxu0 0.0
        %612 = vmatpush.xpose.msra.mxu0 0.0
        %613 = vmatpush.xpose.msra.mxu0 0.0
        %614 = vmatpush.xpose.msra.mxu0 0.0
        %615 = vmatpush.xpose.msra.mxu0 0.0
        %616 = vmatpush.xpose.msra.mxu0 0.0
        %617 = vmatpush.xpose.msra.mxu0 0.0
        %618 = vmatpush.xpose.msra.mxu0 0.0
        %619 = vmatpush.xpose.msra.mxu0 0.0
        %620 = vmatpush.xpose.msra.mxu0 0.0
        %621 = vmatpush.xpose.msra.mxu0 0.0
        %622 = vmatpush.xpose.msra.mxu0 %v562
        %623 = vmatmul.f32.gmra.mxu0 %v565
        %v624 = vpop.f32.mrf.mxu0
        %v625 = vadd.f32 0.0, %v624
        %626 = vdwg.mxu0
        %vm627 = vcmask 64512
        %v628 = vsel %vm627, %v559, -inf
        %629 = vmax.xlane.f32.xlu0 %v628
        %v630 = vpop.xlane.xlu0 %629
        %v631 = vsel %vm627, %v585, -inf
        %632 = vmax.xlane.f32.xlu0 %v631
        %v633 = vpop.xlane.xlu0 %632
        %v634 = vsub.f32 %v559, %v630
        %v635 = vsub.f32 %v585, %v633
        %v636 = vmul.f32 %v634, 1.442695
        %v637 = vpow.pop %v636
        %v638 = vmul.f32 %v635, 1.442695
        %v639 = vpow.pop %v638
        %v640 = vsel %vm627, %v637, 0.0
        %641 = vadd.xlane.f32.xlu0 %v640
        %v642 = vpop.xlane.xlu0 %641
        %v643 = vsel %vm627, %v639, 0.0
        %644 = vadd.xlane.f32.xlu0 %v643
        %v645 = vpop.xlane.xlu0 %644
        %v646 = vrcp.pop %v642
        %v647 = vrcp.pop %v645
        %v648 = vmul.f32 %v637, %v646
        %v649 = vmul.f32 %v639, %v647
        %v650 = vsel %vm627, %v605, -inf
        %651 = vmax.xlane.f32.xlu0 %v650
        %v652 = vpop.xlane.xlu0 %651
        %v653 = vsel %vm627, %v625, -inf
        %654 = vmax.xlane.f32.xlu0 %v653
        %v655 = vpop.xlane.xlu0 %654
        %v656 = vsub.f32 %v605, %v652
        %v657 = vsub.f32 %v625, %v655
        %v658 = vmul.f32 %v656, 1.442695
        %v659 = vpow.pop %v658
        %v660 = vmul.f32 %v657, 1.442695
        %v661 = vpow.pop %v660
        %v662 = vsel %vm627, %v659, 0.0
        %663 = vadd.xlane.f32.xlu0 %v662
        %v664 = vpop.xlane.xlu0 %663
        %v665 = vsel %vm627, %v661, 0.0
        %666 = vadd.xlane.f32.xlu0 %v665
        %v667 = vpop.xlane.xlu0 %666
        %v668 = vrcp.pop %v664
        %v669 = vrcp.pop %v667
        %v670 = vmul.f32 %v659, %v668
        %v671 = vmul.f32 %v661, %v669
        %v672 = vpack.c.bf16 %v648, %v648
        %v673 = vpack.c.bf16 %v649, %v649
        %v674 = vpack.c.bf16 %v392, %v392
        %v675 = vpack.c.bf16 %v393, %v393
        %v677 = vsel %vm627, %v672, 0
        %vm679 = vcmask 1043456
        %v681 = vsel %vm679, %v674, 0
        %683 = vmatpush.bf16.msra.mxu0 0
        %684 = vmatpush.bf16.msra.mxu0 0
        %685 = vmatpush.bf16.msra.mxu0 0
        %686 = vmatpush.bf16.msra.mxu0 0
        %687 = vmatpush.bf16.msra.mxu0 0
        %688 = vmatpush.bf16.msra.mxu0 0
        %689 = vmatpush.bf16.msra.mxu0 0
        %690 = vmatpush.bf16.msra.mxu0 %v681
        %691 = vmatmul.bf16.gmra.mxu0 %v677
        %v692 = vpop.f32.mrf.mxu0
        %v693 = vadd.f32 0.0, %v692
        %v694 = vpop.f32.mrf.mxu0
        %695 = vdwg.mxu0
        %v697 = vsel %vm627, %v673, 0
        %v700 = vsel %vm679, %v675, 0
        %702 = vmatpush.bf16.msra.mxu0 0
        %703 = vmatpush.bf16.msra.mxu0 0
        %704 = vmatpush.bf16.msra.mxu0 0
        %705 = vmatpush.bf16.msra.mxu0 0
        %706 = vmatpush.bf16.msra.mxu0 0
        %707 = vmatpush.bf16.msra.mxu0 0
        %708 = vmatpush.bf16.msra.mxu0 0
        %709 = vmatpush.bf16.msra.mxu0 %v700
        %710 = vmatmul.bf16.gmra.mxu0 %v697
        %v711 = vpop.f32.mrf.mxu0
        %v712 = vadd.f32 0.0, %v711
        %v713 = vpop.f32.mrf.mxu0
        %714 = vdwg.mxu0
        %v715 = vpack.c.bf16 %v670, %v670
        %v716 = vpack.c.bf16 %v671, %v671
        %v717 = vpack.c.bf16 %v390, %v390
        %v718 = vpack.c.bf16 %v391, %v391
        %v720 = vsel %vm627, %v715, 0
        %v723 = vsel %vm679, %v717, 0
        %725 = vmatpush.bf16.msra.mxu0 0
        %726 = vmatpush.bf16.msra.mxu0 0
        %727 = vmatpush.bf16.msra.mxu0 0
        %728 = vmatpush.bf16.msra.mxu0 0
        %729 = vmatpush.bf16.msra.mxu0 0
        %730 = vmatpush.bf16.msra.mxu0 0
        %731 = vmatpush.bf16.msra.mxu0 0
        %732 = vmatpush.bf16.msra.mxu0 %v723
        %733 = vmatmul.bf16.gmra.mxu0 %v720
        %v734 = vpop.f32.mrf.mxu0
        %v735 = vadd.f32 0.0, %v734
        %v736 = vpop.f32.mrf.mxu0
        %737 = vdwg.mxu0
        %v739 = vsel %vm627, %v716, 0
        %v742 = vsel %vm679, %v718, 0
        %744 = vmatpush.bf16.msra.mxu0 0
        %745 = vmatpush.bf16.msra.mxu0 0
        %746 = vmatpush.bf16.msra.mxu0 0
        %747 = vmatpush.bf16.msra.mxu0 0
        %748 = vmatpush.bf16.msra.mxu0 0
        %749 = vmatpush.bf16.msra.mxu0 0
        %750 = vmatpush.bf16.msra.mxu0 0
        %751 = vmatpush.bf16.msra.mxu0 %v742
        %752 = vmatmul.bf16.gmra.mxu0 %v739
        %v753 = vpop.f32.mrf.mxu0
        %v754 = vadd.f32 0.0, %v753
        %v755 = vpop.f32.mrf.mxu0
        %756 = vdwg.mxu0
        %757 = vst.msk [vmem:[%s377] sm:$0xff] %vm407, %v693
        %758 = vst.msk [vmem:[%s377 + $0x8] sm:$0xff] %vm407, %v712
        %759 = vst.msk [vmem:[%s384] sm:$0xff] %vm407, %v735
        %760 = vst.msk [vmem:[%s384 + $0x8] sm:$0xff] %vm407, %v754
        %s761 = sand.u32 %s176, 1
        %s762 = scalar_lea.sflag [#allocation4], %s761
        %s763 = sand.u32 %s176, 1
        %s764 = smul.addr %s763, 16
        %s765 = scalar_lea.vmem [#allocation10], %s764
        %s766 = sand.u32 %s202, 1
        %s767 = scalar_lea.sflag [#allocation12], %s766
        %s768 = sand.u32 %s202, 1
        %s769 = smul.addr %s768, 16
        %s770 = scalar_lea.vmem [#allocation11], %s769
        // Predicated region
        $region61: #{tpu_custom_call.1} parent=43 // pred_check
          %p771 = pneg %p186
        $region62: #{tpu_custom_call.1} parent=43 // pred_check_branch
          %773 = sbr.rel (%p771) target = $region64
        $region63: #{tpu_custom_call.1} parent=43 // pred_region
          %s774 = smul.u32 2, %s32
          %776 = vsyncadd %s762, 0
          %s777 = smul.addr %s774, 8
          %s778 = scalar_lea.hbm %s6, %s777
          %s779 = sshll.u32 %s765, 4
          %s780 = int_to_ptr.vmem [resolvable:$true] %s779
          %s781 = sshll.u32 %s778, 4
          %s782 = int_to_ptr.hbm [resolvable:$true] %s781
          %787 = dma.vmem_to_hbm [thread:$0]  %s780, 256, %s782, %s762, 128, 128, 8
        $region64: #{tpu_custom_call.1} parent=43 // pred_fallthru
          _
        // Predicated region
        $region65: #{tpu_custom_call.1} parent=43 // pred_check
          %p788 = pneg %p212
        $region66: #{tpu_custom_call.1} parent=43 // pred_check_branch
          %790 = sbr.rel (%p788) target = $region68
        $region67: #{tpu_custom_call.1} parent=43 // pred_region
          %s791 = smul.u32 2, %s32
          %793 = vsyncadd %s767, 0
          %s794 = smul.addr %s791, 8
          %s795 = scalar_lea.hbm %s7, %s794
          %s796 = sshll.u32 %s770, 4
          %s797 = int_to_ptr.vmem [resolvable:$true] %s796
          %s798 = sshll.u32 %s795, 4
          %s799 = int_to_ptr.hbm [resolvable:$true] %s798
          %804 = dma.vmem_to_hbm [thread:$0]  %s797, 256, %s799, %s767, 128, 128, 8
        $region68: #{tpu_custom_call.1} parent=43 // pred_fallthru
          _
      $region44: #{tpu_custom_call.1} parent=5 // pred_fallthru
        _
      %p805 = scmp.le.s32.totalorder 2, %s27
      // Predicated region
      $region69: #{tpu_custom_call.1} parent=5 // pred_check
        %p806 = pneg %p805
      $region70: #{tpu_custom_call.1} parent=5 // pred_check_branch
        %808 = sbr.rel (%p806) target = $region72
      $region71: #{tpu_custom_call.1} parent=5 // pred_region
        %s809 = ssub.s32 %s27, 2
        // Predicated region
        $region73: #{tpu_custom_call.1} parent=71 // pred_check
          %p810 = pneg %p192
        $region74: #{tpu_custom_call.1} parent=71 // pred_check_branch
          %812 = sbr.rel (%p810) target = $region76
        $region75: #{tpu_custom_call.1} parent=71 // pred_region
          %s813 = sand.u32 %s177, 1
          %s814 = scalar_lea.sflag [#allocation4], %s813
          %s815 = sand.u32 %s177, 1
          %s816 = smul.addr %s815, 16
          %s817 = scalar_lea.vmem [#allocation10], %s816
          %819 = dma.done %s814, 256
        $region76: #{tpu_custom_call.1} parent=71 // pred_fallthru
          _
        // Predicated region
        $region77: #{tpu_custom_call.1} parent=71 // pred_check
          %p820 = pneg %p218
        $region78: #{tpu_custom_call.1} parent=71 // pred_check_branch
          %822 = sbr.rel (%p820) target = $region80
        $region79: #{tpu_custom_call.1} parent=71 // pred_region
          %s823 = sand.u32 %s203, 1
          %s824 = scalar_lea.sflag [#allocation12], %s823
          %s825 = sand.u32 %s203, 1
          %s826 = smul.addr %s825, 16
          %s827 = scalar_lea.vmem [#allocation11], %s826
          %829 = dma.done %s824, 256
        $region80: #{tpu_custom_call.1} parent=71 // pred_fallthru
          _
      $region72: #{tpu_custom_call.1} parent=5 // pred_fallthru
        _
    $region6: #{tpu_custom_call.1} parent=1 // loop_footer
      %s31 = sadd.s32 1, %s27
    $region7: #{tpu_custom_call.1} parent=1 // loop_footer_branch
      %26 = sbr.rel target = $region3
    $region8: #{tpu_custom_call.1} parent=1 // loop_exit
      _
    %830 = vsyncpa [#allocation3], 1
    %s831 = scalar_lea.sflag [#allocation3], 1
    %832 = vsyncpa %s831, 1
    %833 = vsyncpa [#allocation6], 1
    %s834 = scalar_lea.sflag [#allocation6], 1
    %835 = vsyncpa %s834, 1
    %836 = vsyncpa [#allocation9], 1
    %837 = vsyncpa [#allocation4], 1
    %s838 = scalar_lea.sflag [#allocation4], 1
    %839 = vsyncpa %s838, 1
    %840 = vsyncpa [#allocation12], 1
    %s841 = scalar_lea.sflag [#allocation12], 1
    %842 = vsyncpa %s841, 1

</llo_original>
